<compile_context>
chip_gen: v6e
topology: v6e:2x2x1
jax: 0.10.0
libtpu: 0.0.40
codegen_flags: <defaults>
</compile_context>

<pallas_src>
import numpy as np

import jax
import jax.numpy as jnp
from jax.experimental import pallas as pl
from jax.experimental.pallas import tpu as pltpu

_SLAB_COLS = 1024            # lane-dense width (multiple of 128)
_BLOCK_BYTES_TARGET = 4 << 20  # ~4 MiB per block => <=16 MiB double-buffered


def _log1p_abs_kernel(x_ref, o_ref):
    # Compute in f32 regardless of input dtype (free on a memory-bound op),
    # cast back to the output dtype on store.
    x = x_ref[...].astype(jnp.float32)
    o_ref[...] = jnp.log1p(jnp.abs(x)).astype(o_ref.dtype)


def _round_up(n, m):
    return ((n + m - 1) // m) * m


def _slab_log1p_abs(x2d, out_dtype):
    """Run the kernel on a (rows, _SLAB_COLS) slab. No padding is performed."""
    rows = x2d.shape[0]
    in_bytes = np.dtype(x2d.dtype).itemsize
    out_bytes = np.dtype(out_dtype).itemsize
    # dtype-aware sublane multiple: 8 for 4-byte, 16 for 2-byte, 32 for 1-byte.
    sublane = max(8, 32 // min(in_bytes, out_bytes))

    if rows <= sublane:
        # Block equals the full array dims -> always a legal block shape.
        row_tile = rows
    else:
        target = max(
            sublane,
            _round_up(_BLOCK_BYTES_TARGET // (_SLAB_COLS * max(in_bytes, out_bytes)),
                      sublane),
        )
        # Cap at half the rows (sublane-rounded) so the parallel grid has at
        # least 2 balanced steps -> both v7x TensorCores stay busy.
        half = _round_up(-(-rows // 2), sublane)
        row_tile = min(target, half)

    grid = (pl.cdiv(rows, row_tile),)  # trailing partial block is masked by Pallas

    return pl.pallas_call(
        _log1p_abs_kernel,
        out_shape=jax.ShapeDtypeStruct((rows, _SLAB_COLS), out_dtype),
        grid=grid,
        in_specs=[pl.BlockSpec((row_tile, _SLAB_COLS), lambda i: (i, 0))],
        out_specs=pl.BlockSpec((row_tile, _SLAB_COLS), lambda i: (i, 0)),
        compiler_params=pltpu.CompilerParams(
            dimension_semantics=("parallel",),
            vmem_limit_bytes=32 << 20,
        ),
    )(x2d)


def pallas_log1p_abs(x: jax.Array) -> jax.Array:
    """functional(x) = log1p(|x|), elementwise, via a Pallas TPU kernel."""
    orig_shape = x.shape
    in_dtype = x.dtype
    out_dtype = in_dtype if jnp.issubdtype(in_dtype, jnp.floating) else jnp.float32

    total = int(x.size)
    if total == 0:
        return jnp.log1p(jnp.abs(x.astype(out_dtype)))

    if total % _SLAB_COLS == 0:
        # Common path: lane-dense slab view, single kernel pass, zero padding.
        rows = total // _SLAB_COLS
        out = _slab_log1p_abs(x.reshape(rows, _SLAB_COLS), out_dtype)
        return out.reshape(orig_shape)

    # Rare path: total not a multiple of 1024.  Run the kernel on the aligned
    # body and a tiny plain-jnp epilogue on the short tail (no full-array pad).
    body = (total // _SLAB_COLS) * _SLAB_COLS
    flat = x.reshape(-1)
    tail = jnp.log1p(jnp.abs(flat[body:].astype(jnp.float32))).astype(out_dtype)
    if body == 0:
        return tail.reshape(orig_shape)
    body_out = _slab_log1p_abs(
        flat[:body].reshape(body // _SLAB_COLS, _SLAB_COLS), out_dtype)
    return jnp.concatenate([body_out.reshape(-1), tail]).reshape(orig_shape)


class FunctionalModule:
    """JAX equivalent of the PyTorch FunctionalModule wrapper."""

    def __init__(self, functional):
        self.functional = functional

    def __call__(self, input):
        return self.functional(input)


if __name__ == "__main__":
    root = jax.random.PRNGKey(0)
    k0, k1, k2 = jax.random.split(root, 3)

    module = FunctionalModule(pallas_log1p_abs)

    # Primary check: small NCHW feature map (total divisible by 1024).
    x = jax.random.normal(k0, (2, 4, 16, 16), dtype=jnp.float32)
    out = jax.block_until_ready(module(x))
    ref = jnp.log1p(jnp.abs(x))
    assert out.shape == x.shape and out.dtype == x.dtype
    assert jnp.allclose(out, ref, atol=1e-6, rtol=1e-6)

    # Multi-block path: grid >= 2 with a masked trailing partial row block.
    y = jax.random.normal(k1, (20, 1024), dtype=jnp.float32)
    out_y = jax.block_until_ready(module(y))
    assert jnp.allclose(out_y, jnp.log1p(jnp.abs(y)), atol=1e-6, rtol=1e-6)

    # Non-1024-divisible total: tail handled by the jnp epilogue.
    z = jax.random.normal(k2, (3, 5, 7), dtype=jnp.float32)
    out_z = jax.block_until_ready(module(z))
    assert jnp.allclose(out_z, jnp.log1p(jnp.abs(z)), atol=1e-6, rtol=1e-6)

    print("KERNEL_OK")
</pallas_src>

<mosaic_0001>
module attributes {stable_mosaic.version = 11 : i64} {
  func.func @_log1p_abs_kernel(%arg0: i32, %arg1: memref<2x1024xf32, #tpu.memory_space<vmem>>, %arg2: memref<2x1024xf32, #tpu.memory_space<vmem>>) attributes {dimension_semantics = [#tpu.dimension_semantics<parallel>], iteration_bounds = array<i64: 1>, scalar_prefetch = 0 : i64, scratch_operands = 0 : i64, tpu.core_type = #tpu.core_type<tc>, window_params = [{transform_indices = @transform_0, window_bounds = array<i64: 2, 1024>}, {transform_indices = @transform_1, window_bounds = array<i64: 2, 1024>}]} {
    %c0 = arith.constant 0 : index
    %c0_0 = arith.constant 0 : index
    %0 = vector.load %arg1[%c0, %c0_0] : memref<2x1024xf32, #tpu.memory_space<vmem>>, vector<2x1024xf32>
    %1 = math.absf %0 : vector<2x1024xf32>
    %2 = math.log1p %1 : vector<2x1024xf32>
    %c0_1 = arith.constant 0 : index
    %c0_2 = arith.constant 0 : index
    %3 = vector.load %arg2[%c0_1, %c0_2] : memref<2x1024xf32, #tpu.memory_space<vmem>>, vector<2x1024xf32>
    tpu.vector_store %arg2[%c0_1, %c0_2], %2 {strides = array<i32>} : memref<2x1024xf32, #tpu.memory_space<vmem>>, vector<2x1024xf32>,
    return
  }
  func.func @transform_0(%arg0: i32) -> (i32, i32) {
    %c0_i32 = arith.constant 0 : i32
    %c0_i32_0 = arith.constant 0 : i32
    return %arg0, %c0_i32 : i32, i32
  }
  func.func @transform_1(%arg0: i32) -> (i32, i32) {
    %c0_i32 = arith.constant 0 : i32
    %c0_i32_0 = arith.constant 0 : i32
    return %arg0, %c0_i32 : i32, i32
  }
}

</mosaic_0001>

<llo_original>
// kernel: tpu_custom_call.1
$region0: #{tpu_custom_call.1}
  #allocation0 [shape = 'u32[]', space=smem, size = 0x4, offset = 0x4, fixed_abs, tag = 'smem constant byte address 0x4 - core index']
  #allocation1 [shape = 'u32[144,128]{1,0:T(1,128)}', space=vmem, size = 0x12000, scoped, tag = 'internal scratch']
  %s0 = inlined_call_operand.hbm [shape: f32[2,1024], index: 0, kind: input, shape index: {}]
  %s1 = inlined_call_operand.hbm [shape: f32[2,1024], index: 1, kind: output, shape index: {}]
  %s2 = sld [smem:[#allocation0]]
  $region18: #{tpu_custom_call.1} parent=0
    _
  %s4 = ssub.s32 1, %s2
  %s5 = scalar_select 0, %s4, %s2
  $region1: #{tpu_custom_call.1} parent=0
    #allocation2 [shape = 'u8[8192]{0}', space=vmem, size = 0x2000, scoped, tag = 'input window, operand 0, single buffered']
    #allocation3 [shape = 's32[1]{0}', space=sflag, size = 0x4, scoped, tag = 'scoped memory for tpu_custom_call.1']
    #allocation4 [shape = 's32[1]{0}', space=sflag, size = 0x4, scoped, tag = 'scoped memory for tpu_custom_call.1']
    #allocation5 [shape = 'u8[8192]{0}', space=vmem, size = 0x2000, scoped, tag = 'output window, operand 0, single buffered']
    %6 = vsyncpa [#allocation3], 0
    %7 = vsyncpa [#allocation4], 0
    // Predicated region
    $region2: #{tpu_custom_call.1} parent=1 // pred_check
      _
    $region3: #{tpu_custom_call.1} parent=1 // pred_check_branch
      %9 = sbr.rel (0) target = $region5
    $region4: #{tpu_custom_call.1} parent=1 // pred_region
      %s11 = ssub.s32 256, 256
      %12 = vsyncadd [#allocation3], %s11
      %s14 = sshll.u32 [#allocation2], 4
      %s15 = int_to_ptr.vmem [resolvable:$true] %s14
      %17 = dma.hbm_to_vmem [thread:$0]  %s0, 256, %s15, [#allocation3]
    $region5: #{tpu_custom_call.1} parent=1 // pred_fallthru
      _
    // Predicated region
    $region6: #{tpu_custom_call.1} parent=1 // pred_check
      _
    $region7: #{tpu_custom_call.1} parent=1 // pred_check_branch
      %19 = sbr.rel (0) target = $region9
    $region8: #{tpu_custom_call.1} parent=1 // pred_region
      %20 = dma.done [#allocation3], 256
    $region9: #{tpu_custom_call.1} parent=1 // pred_fallthru
      _
    %v21 = vld [vmem:[#allocation2] sm:$0xff]
    %v22 = vld [vmem:[#allocation2 + $0x8] sm:$0xff]
    %v23 = vand.u32 2147483647, %v21
    %v24 = vand.u32 2147483647, %v22
    %v25 = vadd.f32 %v23, 1.0
    %v26 = vlog2.pop %v25
    %v27 = vmul.f32 %v26, 0.6931472
    %v28 = vmul.f32 -0.5, %v23
    %v29 = vadd.f32 %v28, 1.0
    %v30 = vmul.f32 %v29, %v23
    %v31 = vand.u32 2147483647, %v23
    %vm32 = vcmp.lt.f32.partialorder %v31, 0.0004427343
    %v33 = vsel %vm32, %v30, %v27
    %v34 = vadd.f32 %v24, 1.0
    %v35 = vlog2.pop %v34
    %v36 = vmul.f32 %v35, 0.6931472
    %v37 = vmul.f32 -0.5, %v24
    %v38 = vadd.f32 %v37, 1.0
    %v39 = vmul.f32 %v38, %v24
    %v40 = vand.u32 2147483647, %v24
    %vm41 = vcmp.lt.f32.partialorder %v40, 0.0004427343
    %v42 = vsel %vm41, %v39, %v36
    %43 = vst [vmem:[#allocation5] sm:$0xff] %v33
    %44 = vst [vmem:[#allocation5 + $0x8] sm:$0xff] %v42
    // Predicated region
    $region10: #{tpu_custom_call.1} parent=1 // pred_check
      _
    $region11: #{tpu_custom_call.1} parent=1 // pred_check_branch
      %46 = sbr.rel (0) target = $region13
    $region12: #{tpu_custom_call.1} parent=1 // pred_region
      %s48 = ssub.s32 256, 256
      %49 = vsyncadd [#allocation4], %s48
      %s51 = sshll.u32 [#allocation5], 4
      %s52 = int_to_ptr.vmem [resolvable:$true] %s51
      %54 = dma.vmem_to_hbm [thread:$0]  %s52, 256, %s1, [#allocation4]
    $region13: #{tpu_custom_call.1} parent=1 // pred_fallthru
      _
    // Predicated region
    $region14: #{tpu_custom_call.1} parent=1 // pred_check
      _
    $region15: #{tpu_custom_call.1} parent=1 // pred_check_branch
      %56 = sbr.rel (0) target = $region17
    $region16: #{tpu_custom_call.1} parent=1 // pred_region
      %57 = dma.done [#allocation4], 256
    $region17: #{tpu_custom_call.1} parent=1 // pred_fallthru
      _
    %58 = vsyncpa [#allocation3], 1
    %59 = vsyncpa [#allocation4], 1

</llo_original>
